<compile_context>
chip_gen: v7x
topology: tpu7x:2x2x1
jax: 0.10.0
libtpu: 0.0.40
codegen_flags: <defaults>
</compile_context>

<pallas_src>
import jax
import jax.numpy as jnp
from jax.experimental import pallas as pl
from jax.experimental.pallas import tpu as pltpu


def _conv1x1_whole_kernel(x_ref, w_ref, o_ref):
    """Single grid step: whole activation slab resident in VMEM.

    x_ref: [B, C, HW]    (bf16, produced upstream)
    w_ref: [Cout, C]     (bf16 parameter)
    o_ref: [B, Cout, HW] (float32)
    """
    w = w_ref[...]
    for b in range(x_ref.shape[0]):  # small static B -> unrolled dots, no transpose
        o_ref[b] = jnp.dot(
            w, x_ref[b], preferred_element_type=jnp.float32
        ).astype(o_ref.dtype)


def _conv1x1_batch_kernel(x_ref, w_ref, o_ref):
    """One batch element per grid step (only used when per-step work is large).

    x_ref: [C, HW]   (batch dim squeezed by the BlockSpec)
    w_ref: [Cout, C] (grid-invariant block)
    o_ref: [Cout, HW]
    """
    o_ref[...] = jnp.dot(
        w_ref[...], x_ref[...], preferred_element_type=jnp.float32
    ).astype(o_ref.dtype)


def conv1x1_nchw_pallas(x, weight2d, *, min_parallel_step_bytes=2 << 20):
    """1x1 conv (bias=False) computed directly in NCHW layout.

    x:        [B, C, H, W]  (bf16 or f32; no cast added here -- dtype comes from producer)
    weight2d: [Cout, C]     (bf16 or f32; converted once at param-load time by caller)
    returns   [B, Cout, H, W] float32
    """
    B, C, H, W = x.shape
    Cout = weight2d.shape[0]
    HW = H * W

    x3 = x.reshape(B, C, HW)  # free reshape, no transpose
    out_dtype = jnp.float32

    flops = 2 * B * Cout * C * HW
    bytes_accessed = (
        x3.size * x3.dtype.itemsize
        + weight2d.size * weight2d.dtype.itemsize
        + B * Cout * HW * jnp.dtype(out_dtype).itemsize
    )
    cost = pl.CostEstimate(
        flops=flops, transcendentals=0, bytes_accessed=bytes_accessed
    )

    # Only shard over batch (v7x megacore) when each step carries enough work;
    # otherwise a single step avoids per-step pipeline overhead entirely.
    per_step_bytes = C * HW * x3.dtype.itemsize
    use_parallel = (B >= 2) and (per_step_bytes >= min_parallel_step_bytes)

    if use_parallel:
        out3 = pl.pallas_call(
            _conv1x1_batch_kernel,
            out_shape=jax.ShapeDtypeStruct((B, Cout, HW), out_dtype),
            grid_spec=pl.GridSpec(
                grid=(B,),
                in_specs=[
                    pl.BlockSpec((pl.Squeezed(), C, HW), lambda b: (b, 0, 0)),
                    # grid-invariant weight block: fetched once, revisited every step
                    pl.BlockSpec((Cout, C), lambda b: (0, 0)),
                ],
                out_specs=pl.BlockSpec((pl.Squeezed(), Cout, HW), lambda b: (b, 0, 0)),
            ),
            compiler_params=pltpu.CompilerParams(
                dimension_semantics=("parallel",),
            ),
            cost_estimate=cost,
        )(x3, weight2d)
    else:
        out3 = pl.pallas_call(
            _conv1x1_whole_kernel,
            out_shape=jax.ShapeDtypeStruct((B, Cout, HW), out_dtype),
            grid_spec=pl.GridSpec(
                grid=(1,),
                in_specs=[
                    pl.BlockSpec((B, C, HW), lambda i: (0, 0, 0)),
                    pl.BlockSpec((Cout, C), lambda i: (0, 0)),
                ],
                out_specs=pl.BlockSpec((B, Cout, HW), lambda i: (0, 0, 0)),
            ),
            compiler_params=pltpu.CompilerParams(
                dimension_semantics=("arbitrary",),
            ),
            cost_estimate=cost,
        )(x3, weight2d)

    return out3.reshape(B, Cout, H, W)


@jax.jit
def object_model_forward(det_out, det_out_1, conv_weight2d):
    """Mirrors object_model.forward:
        output, output_1 = detector(input)   # synthesized outside (backbone undefined)
        output = conv(output)                # 1x1 conv head (Pallas)
        return (output, output_1)
    """
    out = conv1x1_nchw_pallas(det_out, conv_weight2d)
    return out, det_out_1


if __name__ == "__main__":
    num_objects = 4
    num_anchors = 5                            # Yolo anchor count
    c_in = 1024
    c_out = num_anchors * (5 + num_objects)    # 45

    B, H, W = 2, 8, 8

    key = jax.random.PRNGKey(0)
    k_feat, k_feat1, k_w = jax.random.split(key, 3)

    # Synthesized detector outputs (stand-ins for YoloD(input)), emitted in bf16
    # by the "producer" as the perf review recommends.
    det_out = jax.random.normal(k_feat, (B, c_in, H, W), dtype=jnp.float32).astype(
        jnp.bfloat16
    )
    det_out_1 = jax.random.normal(
        k_feat1, (B, 512, 2 * H, 2 * W), dtype=jnp.float32
    ).astype(jnp.bfloat16)

    # Conv weight, matches nn.Conv2d(1024, 45, 1, 1, 0, bias=False); converted to
    # bf16 [Cout, C] ONCE at parameter-load time (outside the jitted forward).
    conv_weight = jax.random.normal(k_w, (c_out, c_in, 1, 1), dtype=jnp.float32) * 0.02
    conv_weight2d = conv_weight.reshape(c_out, c_in).astype(jnp.bfloat16)

    out, out_1 = object_model_forward(det_out, det_out_1, conv_weight2d)
    out = jax.block_until_ready(out)
    out_1 = jax.block_until_ready(out_1)

    # Reference: same bf16 operands, f32 accumulation (bf16 x bf16 products are exact
    # in f32, so only accumulation order differs from the kernel).
    # NOTE: this intentionally differs from PyTorch's f32 Conv2d numerics (bf16 weights
    # and activations); tolerance vs the true f32 model is ~1e-2 relative.
    x_f32 = det_out.astype(jnp.float32)
    w_f32 = conv_weight2d.astype(jnp.float32)
    ref = jnp.einsum("bchw,oc->bohw", x_f32, w_f32)

    assert out.shape == (B, c_out, H, W)
    assert out_1.shape == det_out_1.shape
    assert jnp.allclose(out, ref, atol=1e-3, rtol=1e-3)

    print("KERNEL_OK")
</pallas_src>

<mosaic_0001>
module attributes {stable_mosaic.version = 11 : i64} {
  func.func @_conv1x1_whole_kernel(%arg0: i32, %arg1: memref<2x1024x64xbf16, #tpu.memory_space<vmem>>, %arg2: memref<45x1024xbf16, #tpu.memory_space<vmem>>, %arg3: memref<2x45x64xf32, #tpu.memory_space<vmem>>) attributes {dimension_semantics = [#tpu.dimension_semantics<arbitrary>], iteration_bounds = array<i64: 1>, scalar_prefetch = 0 : i64, scratch_operands = 0 : i64, tpu.core_type = #tpu.core_type<tc>, window_params = [{pipeline_mode = #tpu.pipeline_mode<synchronous>, transform_indices = @transform_0, window_bounds = array<i64: 2, 1024, 64>}, {pipeline_mode = #tpu.pipeline_mode<synchronous>, transform_indices = @transform_1, window_bounds = array<i64: 45, 1024>}, {pipeline_mode = #tpu.pipeline_mode<synchronous>, transform_indices = @transform_2, window_bounds = array<i64: 2, 45, 64>}]} {
    %c0 = arith.constant 0 : index
    %c0_0 = arith.constant 0 : index
    %0 = vector.load %arg2[%c0, %c0_0] : memref<45x1024xbf16, #tpu.memory_space<vmem>>, vector<45x1024xbf16>
    %c0_1 = arith.constant 0 : index
    %c0_2 = arith.constant 0 : index
    %c0_3 = arith.constant 0 : index
    %1 = vector.load %arg1[%c0_1, %c0_2, %c0_3] : memref<2x1024x64xbf16, #tpu.memory_space<vmem>>, vector<1x1024x64xbf16>
    %2 = vector.shape_cast %1 : vector<1x1024x64xbf16> to vector<1024x64xbf16>
    %cst = arith.constant dense<0.000000e+00> : vector<45x64xf32>
    %3 = tpu.matmul %0, %2, %cst {dimension_numbers = #tpu.dot_dimension_numbers<[1], [0], [0], [1], [0, 0, 1, 1], [], []>} : vector<45x1024xbf16>, vector<1024x64xbf16>, vector<45x64xf32> -> vector<45x64xf32>
    %c0_4 = arith.constant 0 : index
    %c0_5 = arith.constant 0 : index
    %c0_6 = arith.constant 0 : index
    %4 = vector.load %arg3[%c0_4, %c0_5, %c0_6] : memref<2x45x64xf32, #tpu.memory_space<vmem>>, vector<1x45x64xf32>
    %5 = vector.shape_cast %4 : vector<1x45x64xf32> to vector<45x64xf32>
    %6 = vector.shape_cast %3 : vector<45x64xf32> to vector<1x45x64xf32>
    tpu.vector_store %arg3[%c0_4, %c0_5, %c0_6], %6 {strides = array<i32>} : memref<2x45x64xf32, #tpu.memory_space<vmem>>, vector<1x45x64xf32>,
    %c1 = arith.constant 1 : index
    %c0_7 = arith.constant 0 : index
    %c0_8 = arith.constant 0 : index
    %7 = vector.load %arg1[%c1, %c0_7, %c0_8] : memref<2x1024x64xbf16, #tpu.memory_space<vmem>>, vector<1x1024x64xbf16>
    %8 = vector.shape_cast %7 : vector<1x1024x64xbf16> to vector<1024x64xbf16>
    %cst_9 = arith.constant dense<0.000000e+00> : vector<45x64xf32>
    %9 = tpu.matmul %0, %8, %cst_9 {dimension_numbers = #tpu.dot_dimension_numbers<[1], [0], [0], [1], [0, 0, 1, 1], [], []>} : vector<45x1024xbf16>, vector<1024x64xbf16>, vector<45x64xf32> -> vector<45x64xf32>
    %c1_10 = arith.constant 1 : index
    %c0_11 = arith.constant 0 : index
    %c0_12 = arith.constant 0 : index
    %10 = vector.load %arg3[%c1_10, %c0_11, %c0_12] : memref<2x45x64xf32, #tpu.memory_space<vmem>>, vector<1x45x64xf32>
    %11 = vector.shape_cast %10 : vector<1x45x64xf32> to vector<45x64xf32>
    %12 = vector.shape_cast %9 : vector<45x64xf32> to vector<1x45x64xf32>
    tpu.vector_store %arg3[%c1_10, %c0_11, %c0_12], %12 {strides = array<i32>} : memref<2x45x64xf32, #tpu.memory_space<vmem>>, vector<1x45x64xf32>,
    return
  }
  func.func @transform_0(%arg0: i32) -> (i32, i32, i32) {
    %c0_i32 = arith.constant 0 : i32
    %c0_i32_0 = arith.constant 0 : i32
    %c0_i32_1 = arith.constant 0 : i32
    %c0_i32_2 = arith.constant 0 : i32
    return %c0_i32, %c0_i32_0, %c0_i32_1 : i32, i32, i32
  }
  func.func @transform_1(%arg0: i32) -> (i32, i32) {
    %c0_i32 = arith.constant 0 : i32
    %c0_i32_0 = arith.constant 0 : i32
    %c0_i32_1 = arith.constant 0 : i32
    return %c0_i32, %c0_i32_0 : i32, i32
  }
  func.func @transform_2(%arg0: i32) -> (i32, i32, i32) {
    %c0_i32 = arith.constant 0 : i32
    %c0_i32_0 = arith.constant 0 : i32
    %c0_i32_1 = arith.constant 0 : i32
    %c0_i32_2 = arith.constant 0 : i32
    return %c0_i32, %c0_i32_0, %c0_i32_1 : i32, i32, i32
  }
}

</mosaic_0001>

<llo_original>
// kernel: object_model_forward.1
$region0: #{object_model_forward.1}
  #allocation0 [shape = 'u32[]', space=smem, size = 0x4, offset = 0x4, fixed_abs, tag = 'smem constant byte address 0x4 - core index']
  #allocation1 [shape = 'u32[144,128]{1,0:T(1,128)}', space=vmem, size = 0x12000, scoped, tag = 'internal scratch']
  %s0 = inlined_call_operand.vmem [shape: bf16[2,1024,64], index: 0, kind: input, shape index: {}]
  %s1 = inlined_call_operand.vmem [shape: bf16[45,1024], index: 1, kind: input, shape index: {}]
  %s2 = inlined_call_operand.vmem [shape: f32[2,45,64], index: 2, kind: output, shape index: {}]
  %s3 = sld [smem:[#allocation0]]
  $region18: #{object_model_forward.1} parent=0
    _
  %s5 = ssub.s32 1, %s3
  %s6 = scalar_select 0, %s5, %s3
  // Predicated region
  $region2: #{object_model_forward.1} parent=0 // pred_check
    _
  $region3: #{object_model_forward.1} parent=0 // pred_check_branch
    %8 = sbr.rel (0) target = $region5
  $region4: #{object_model_forward.1} parent=0 // pred_region
    _
  $region5: #{object_model_forward.1} parent=0 // pred_fallthru
    _
  // Predicated region
  $region6: #{object_model_forward.1} parent=0 // pred_check
    _
  $region7: #{object_model_forward.1} parent=0 // pred_check_branch
    %10 = sbr.rel (0) target = $region9
  $region8: #{object_model_forward.1} parent=0 // pred_region
    _
  $region9: #{object_model_forward.1} parent=0 // pred_fallthru
    _
  %v12 = vld [vmem:[%s1] sm:$0xff]
  %v13 = vld [vmem:[%s1 + $0x8] sm:$0xff]
  %v14 = vld [vmem:[%s1 + $0x10] sm:$0xff]
  %v15 = vld [vmem:[%s1 + $0x18] sm:$0xff]
  %v16 = vld [vmem:[%s1 + $0x20] sm:$0xff]
  %v17 = vld [vmem:[%s1 + $0x28] sm:$0xff]
  %v18 = vld [vmem:[%s1 + $0x30] sm:$0xff]
  %v19 = vld [vmem:[%s1 + $0x38] sm:$0xff]
  %v20 = vld [vmem:[%s1 + $0x40] sm:$0xff]
  %v21 = vld [vmem:[%s1 + $0x48] sm:$0xff]
  %v22 = vld [vmem:[%s1 + $0x50] sm:$0xff]
  %v23 = vld [vmem:[%s1 + $0x58] sm:$0xff]
  %v24 = vld [vmem:[%s1 + $0x60] sm:$0xff]
  %v25 = vld [vmem:[%s1 + $0x68] sm:$0xff]
  %v26 = vld [vmem:[%s1 + $0x70] sm:$0xff]
  %v27 = vld [vmem:[%s1 + $0x78] sm:$0xff]
  %v28 = vld [vmem:[%s1 + $0x80] sm:$0xff]
  %v29 = vld [vmem:[%s1 + $0x88] sm:$0xff]
  %v30 = vld [vmem:[%s1 + $0x90] sm:$0xff]
  %v31 = vld [vmem:[%s1 + $0x98] sm:$0xff]
  %v32 = vld [vmem:[%s1 + $0xa0] sm:$0x77]
  %v33 = vld [vmem:[%s1 + $0xa8] sm:$0x77]
  %v34 = vld [vmem:[%s1 + $0xb0] sm:$0x77]
  %v35 = vld [vmem:[%s1 + $0xb8] sm:$0x77]
  %v36 = vld [vmem:[%s0] sm:$0xf]
  %v37 = vld [vmem:[%s0 + $0x4] sm:$0xf]
  %v38 = vld [vmem:[%s0 + $0x8] sm:$0xf]
  %v39 = vld [vmem:[%s0 + $0xc] sm:$0xf]
  %v40 = vld [vmem:[%s0 + $0x10] sm:$0xf]
  %v41 = vld [vmem:[%s0 + $0x14] sm:$0xf]
  %v42 = vld [vmem:[%s0 + $0x18] sm:$0xf]
  %v43 = vld [vmem:[%s0 + $0x1c] sm:$0xf]
  %v44 = vld [vmem:[%s0 + $0x20] sm:$0xf]
  %v45 = vld [vmem:[%s0 + $0x24] sm:$0xf]
  %v46 = vld [vmem:[%s0 + $0x28] sm:$0xf]
  %v47 = vld [vmem:[%s0 + $0x2c] sm:$0xf]
  %v48 = vld [vmem:[%s0 + $0x30] sm:$0xf]
  %v49 = vld [vmem:[%s0 + $0x34] sm:$0xf]
  %v50 = vld [vmem:[%s0 + $0x38] sm:$0xf]
  %v51 = vld [vmem:[%s0 + $0x3c] sm:$0xf]
  %v52 = vld [vmem:[%s0 + $0x40] sm:$0xf]
  %v53 = vld [vmem:[%s0 + $0x44] sm:$0xf]
  %v54 = vld [vmem:[%s0 + $0x48] sm:$0xf]
  %v55 = vld [vmem:[%s0 + $0x4c] sm:$0xf]
  %v56 = vld [vmem:[%s0 + $0x50] sm:$0xf]
  %v57 = vld [vmem:[%s0 + $0x54] sm:$0xf]
  %v58 = vld [vmem:[%s0 + $0x58] sm:$0xf]
  %v59 = vld [vmem:[%s0 + $0x5c] sm:$0xf]
  %v60 = vld [vmem:[%s0 + $0x60] sm:$0xf]
  %v61 = vld [vmem:[%s0 + $0x64] sm:$0xf]
  %v62 = vld [vmem:[%s0 + $0x68] sm:$0xf]
  %v63 = vld [vmem:[%s0 + $0x6c] sm:$0xf]
  %v64 = vld [vmem:[%s0 + $0x70] sm:$0xf]
  %v65 = vld [vmem:[%s0 + $0x74] sm:$0xf]
  %v66 = vld [vmem:[%s0 + $0x78] sm:$0xf]
  %v67 = vld [vmem:[%s0 + $0x7c] sm:$0xf]
  %v68 = vld [vmem:[%s0 + $0x80] sm:$0xf]
  %v69 = vld [vmem:[%s0 + $0x84] sm:$0xf]
  %v70 = vld [vmem:[%s0 + $0x88] sm:$0xf]
  %v71 = vld [vmem:[%s0 + $0x8c] sm:$0xf]
  %v72 = vld [vmem:[%s0 + $0x90] sm:$0xf]
  %v73 = vld [vmem:[%s0 + $0x94] sm:$0xf]
  %v74 = vld [vmem:[%s0 + $0x98] sm:$0xf]
  %v75 = vld [vmem:[%s0 + $0x9c] sm:$0xf]
  %v76 = vld [vmem:[%s0 + $0xa0] sm:$0xf]
  %v77 = vld [vmem:[%s0 + $0xa4] sm:$0xf]
  %v78 = vld [vmem:[%s0 + $0xa8] sm:$0xf]
  %v79 = vld [vmem:[%s0 + $0xac] sm:$0xf]
  %v80 = vld [vmem:[%s0 + $0xb0] sm:$0xf]
  %v81 = vld [vmem:[%s0 + $0xb4] sm:$0xf]
  %v82 = vld [vmem:[%s0 + $0xb8] sm:$0xf]
  %v83 = vld [vmem:[%s0 + $0xbc] sm:$0xf]
  %v84 = vld [vmem:[%s0 + $0xc0] sm:$0xf]
  %v85 = vld [vmem:[%s0 + $0xc4] sm:$0xf]
  %v86 = vld [vmem:[%s0 + $0xc8] sm:$0xf]
  %v87 = vld [vmem:[%s0 + $0xcc] sm:$0xf]
  %v88 = vld [vmem:[%s0 + $0xd0] sm:$0xf]
  %v89 = vld [vmem:[%s0 + $0xd4] sm:$0xf]
  %v90 = vld [vmem:[%s0 + $0xd8] sm:$0xf]
  %v91 = vld [vmem:[%s0 + $0xdc] sm:$0xf]
  %v92 = vld [vmem:[%s0 + $0xe0] sm:$0xf]
  %v93 = vld [vmem:[%s0 + $0xe4] sm:$0xf]
  %v94 = vld [vmem:[%s0 + $0xe8] sm:$0xf]
  %v95 = vld [vmem:[%s0 + $0xec] sm:$0xf]
  %v96 = vld [vmem:[%s0 + $0xf0] sm:$0xf]
  %v97 = vld [vmem:[%s0 + $0xf4] sm:$0xf]
  %v98 = vld [vmem:[%s0 + $0xf8] sm:$0xf]
  %v99 = vld [vmem:[%s0 + $0xfc] sm:$0xf]
  %v100 = vld [vmem:[%s0 + $0x100] sm:$0xf]
  %v101 = vld [vmem:[%s0 + $0x104] sm:$0xf]
  %v102 = vld [vmem:[%s0 + $0x108] sm:$0xf]
  %v103 = vld [vmem:[%s0 + $0x10c] sm:$0xf]
  %v104 = vld [vmem:[%s0 + $0x110] sm:$0xf]
  %v105 = vld [vmem:[%s0 + $0x114] sm:$0xf]
  %v106 = vld [vmem:[%s0 + $0x118] sm:$0xf]
  %v107 = vld [vmem:[%s0 + $0x11c] sm:$0xf]
  %v108 = vld [vmem:[%s0 + $0x120] sm:$0xf]
  %v109 = vld [vmem:[%s0 + $0x124] sm:$0xf]
  %v110 = vld [vmem:[%s0 + $0x128] sm:$0xf]
  %v111 = vld [vmem:[%s0 + $0x12c] sm:$0xf]
  %v112 = vld [vmem:[%s0 + $0x130] sm:$0xf]
  %v113 = vld [vmem:[%s0 + $0x134] sm:$0xf]
  %v114 = vld [vmem:[%s0 + $0x138] sm:$0xf]
  %v115 = vld [vmem:[%s0 + $0x13c] sm:$0xf]
  %v116 = vld [vmem:[%s0 + $0x140] sm:$0xf]
  %v117 = vld [vmem:[%s0 + $0x144] sm:$0xf]
  %v118 = vld [vmem:[%s0 + $0x148] sm:$0xf]
  %v119 = vld [vmem:[%s0 + $0x14c] sm:$0xf]
  %v120 = vld [vmem:[%s0 + $0x150] sm:$0xf]
  %v121 = vld [vmem:[%s0 + $0x154] sm:$0xf]
  %v122 = vld [vmem:[%s0 + $0x158] sm:$0xf]
  %v123 = vld [vmem:[%s0 + $0x15c] sm:$0xf]
  %v124 = vld [vmem:[%s0 + $0x160] sm:$0xf]
  %v125 = vld [vmem:[%s0 + $0x164] sm:$0xf]
  %v126 = vld [vmem:[%s0 + $0x168] sm:$0xf]
  %v127 = vld [vmem:[%s0 + $0x16c] sm:$0xf]
  %v128 = vld [vmem:[%s0 + $0x170] sm:$0xf]
  %v129 = vld [vmem:[%s0 + $0x174] sm:$0xf]
  %v130 = vld [vmem:[%s0 + $0x178] sm:$0xf]
  %v131 = vld [vmem:[%s0 + $0x17c] sm:$0xf]
  %v132 = vld [vmem:[%s0 + $0x180] sm:$0xf]
  %v133 = vld [vmem:[%s0 + $0x184] sm:$0xf]
  %v134 = vld [vmem:[%s0 + $0x188] sm:$0xf]
  %v135 = vld [vmem:[%s0 + $0x18c] sm:$0xf]
  %v136 = vld [vmem:[%s0 + $0x190] sm:$0xf]
  %v137 = vld [vmem:[%s0 + $0x194] sm:$0xf]
  %v138 = vld [vmem:[%s0 + $0x198] sm:$0xf]
  %v139 = vld [vmem:[%s0 + $0x19c] sm:$0xf]
  %v140 = vld [vmem:[%s0 + $0x1a0] sm:$0xf]
  %v141 = vld [vmem:[%s0 + $0x1a4] sm:$0xf]
  %v142 = vld [vmem:[%s0 + $0x1a8] sm:$0xf]
  %v143 = vld [vmem:[%s0 + $0x1ac] sm:$0xf]
  %v144 = vld [vmem:[%s0 + $0x1b0] sm:$0xf]
  %v145 = vld [vmem:[%s0 + $0x1b4] sm:$0xf]
  %v146 = vld [vmem:[%s0 + $0x1b8] sm:$0xf]
  %v147 = vld [vmem:[%s0 + $0x1bc] sm:$0xf]
  %v148 = vld [vmem:[%s0 + $0x1c0] sm:$0xf]
  %v149 = vld [vmem:[%s0 + $0x1c4] sm:$0xf]
  %v150 = vld [vmem:[%s0 + $0x1c8] sm:$0xf]
  %v151 = vld [vmem:[%s0 + $0x1cc] sm:$0xf]
  %v152 = vld [vmem:[%s0 + $0x1d0] sm:$0xf]
  %v153 = vld [vmem:[%s0 + $0x1d4] sm:$0xf]
  %v154 = vld [vmem:[%s0 + $0x1d8] sm:$0xf]
  %v155 = vld [vmem:[%s0 + $0x1dc] sm:$0xf]
  %v156 = vld [vmem:[%s0 + $0x1e0] sm:$0xf]
  %v157 = vld [vmem:[%s0 + $0x1e4] sm:$0xf]
  %v158 = vld [vmem:[%s0 + $0x1e8] sm:$0xf]
  %v159 = vld [vmem:[%s0 + $0x1ec] sm:$0xf]
  %v160 = vld [vmem:[%s0 + $0x1f0] sm:$0xf]
  %v161 = vld [vmem:[%s0 + $0x1f4] sm:$0xf]
  %v162 = vld [vmem:[%s0 + $0x1f8] sm:$0xf]
  %v163 = vld [vmem:[%s0 + $0x1fc] sm:$0xf]
  %v188 = vunpack.c.l.b16 %v12
  %v189 = vunpack.c.h.b16 %v12
  %v190 = vunpack.c.l.b16 %v13
  %v191 = vunpack.c.h.b16 %v13
  %v192 = vunpack.c.l.b16 %v14
  %v193 = vunpack.c.h.b16 %v14
  %v194 = vunpack.c.l.b16 %v15
  %v195 = vunpack.c.h.b16 %v15
  %v196 = vunpack.c.l.b16 %v16
  %v197 = vunpack.c.h.b16 %v16
  %v198 = vunpack.c.l.b16 %v17
  %v199 = vunpack.c.h.b16 %v17
  %v200 = vunpack.c.l.b16 %v18
  %v201 = vunpack.c.h.b16 %v18
  %v202 = vunpack.c.l.b16 %v19
  %v203 = vunpack.c.h.b16 %v19
  %v204 = vunpack.c.l.b16 %v20
  %v205 = vunpack.c.h.b16 %v20
  %v206 = vunpack.c.l.b16 %v21
  %v207 = vunpack.c.h.b16 %v21
  %v208 = vunpack.c.l.b16 %v22
  %v209 = vunpack.c.h.b16 %v22
  %v210 = vunpack.c.l.b16 %v23
  %v211 = vunpack.c.h.b16 %v23
  %v212 = vunpack.c.l.b16 %v24
  %v213 = vunpack.c.h.b16 %v24
  %v214 = vunpack.c.l.b16 %v25
  %v215 = vunpack.c.h.b16 %v25
  %v216 = vunpack.c.l.b16 %v26
  %v217 = vunpack.c.h.b16 %v26
  %v218 = vunpack.c.l.b16 %v27
  %v219 = vunpack.c.h.b16 %v27
  %v220 = vunpack.c.l.b16 %v28
  %v221 = vunpack.c.h.b16 %v28
  %v222 = vunpack.c.l.b16 %v29
  %v223 = vunpack.c.h.b16 %v29
  %v224 = vunpack.c.l.b16 %v30
  %v225 = vunpack.c.h.b16 %v30
  %v226 = vunpack.c.l.b16 %v31
  %v227 = vunpack.c.h.b16 %v31
  %v228 = vunpack.c.l.b16 %v32
  %v229 = vunpack.c.h.b16 %v32
  %v230 = vunpack.c.l.b16 %v33
  %v231 = vunpack.c.h.b16 %v33
  %v232 = vunpack.c.l.b16 %v34
  %v233 = vunpack.c.h.b16 %v34
  %v234 = vunpack.c.l.b16 %v35
  %v235 = vunpack.c.h.b16 %v35
  %v236 = vpack.c.b16 %v196, %v188
  %v237 = vpack.c.b16 %v197, %v189
  %v238 = vpack.c.b16 %v198, %v190
  %v239 = vpack.c.b16 %v199, %v191
  %v240 = vpack.c.b16 %v200, %v192
  %v241 = vpack.c.b16 %v201, %v193
  %v242 = vpack.c.b16 %v202, %v194
  %v243 = vpack.c.b16 %v203, %v195
  %v244 = vpack.c.b16 %v212, %v204
  %v245 = vpack.c.b16 %v213, %v205
  %v246 = vpack.c.b16 %v214, %v206
  %v247 = vpack.c.b16 %v215, %v207
  %v248 = vpack.c.b16 %v216, %v208
  %v249 = vpack.c.b16 %v217, %v209
  %v250 = vpack.c.b16 %v218, %v210
  %v251 = vpack.c.b16 %v219, %v211
  %v252 = vpack.c.b16 %v228, %v220
  %v253 = vpack.c.b16 %v229, %v221
  %v254 = vpack.c.b16 %v230, %v222
  %v255 = vpack.c.b16 %v231, %v223
  %v256 = vpack.c.b16 %v232, %v224
  %v257 = vpack.c.b16 %v233, %v225
  %v258 = vpack.c.b16 %v234, %v226
  %v259 = vpack.c.b16 %v235, %v227
  %v412 = vunpack.c.l.b16 %v36
  %v413 = vunpack.c.l.b16 %v37
  %v414 = vunpack.c.l.b16 %v38
  %v415 = vunpack.c.l.b16 %v39
  %v416 = vunpack.c.l.b16 %v40
  %v417 = vunpack.c.l.b16 %v41
  %v418 = vunpack.c.l.b16 %v42
  %v419 = vunpack.c.l.b16 %v43
  %v420 = vunpack.c.l.b16 %v44
  %v421 = vunpack.c.l.b16 %v45
  %v422 = vunpack.c.l.b16 %v46
  %v423 = vunpack.c.l.b16 %v47
  %v424 = vunpack.c.l.b16 %v48
  %v425 = vunpack.c.l.b16 %v49
  %v426 = vunpack.c.l.b16 %v50
  %v427 = vunpack.c.l.b16 %v51
  %v428 = vunpack.c.l.b16 %v52
  %v429 = vunpack.c.l.b16 %v53
  %v430 = vunpack.c.l.b16 %v54
  %v431 = vunpack.c.l.b16 %v55
  %v432 = vunpack.c.l.b16 %v56
  %v433 = vunpack.c.l.b16 %v57
  %v434 = vunpack.c.l.b16 %v58
  %v435 = vunpack.c.l.b16 %v59
  %v436 = vunpack.c.l.b16 %v60
  %v437 = vunpack.c.l.b16 %v61
  %v438 = vunpack.c.l.b16 %v62
  %v439 = vunpack.c.l.b16 %v63
  %v440 = vunpack.c.l.b16 %v64
  %v441 = vunpack.c.l.b16 %v65
  %v442 = vunpack.c.l.b16 %v66
  %v443 = vunpack.c.l.b16 %v67
  %v444 = vunpack.c.l.b16 %v68
  %v445 = vunpack.c.l.b16 %v69
  %v446 = vunpack.c.l.b16 %v70
  %v447 = vunpack.c.l.b16 %v71
  %v448 = vunpack.c.l.b16 %v72
  %v449 = vunpack.c.l.b16 %v73
  %v450 = vunpack.c.l.b16 %v74
  %v451 = vunpack.c.l.b16 %v75
  %v452 = vunpack.c.l.b16 %v76
  %v453 = vunpack.c.l.b16 %v77
  %v454 = vunpack.c.l.b16 %v78
  %v455 = vunpack.c.l.b16 %v79
  %v456 = vunpack.c.l.b16 %v80
  %v457 = vunpack.c.l.b16 %v81
  %v458 = vunpack.c.l.b16 %v82
  %v459 = vunpack.c.l.b16 %v83
  %v460 = vunpack.c.l.b16 %v84
  %v461 = vunpack.c.l.b16 %v85
  %v462 = vunpack.c.l.b16 %v86
  %v463 = vunpack.c.l.b16 %v87
  %v464 = vunpack.c.l.b16 %v88
  %v465 = vunpack.c.l.b16 %v89
  %v466 = vunpack.c.l.b16 %v90
  %v467 = vunpack.c.l.b16 %v91
  %v468 = vunpack.c.l.b16 %v92
  %v469 = vunpack.c.l.b16 %v93
  %v470 = vunpack.c.l.b16 %v94
  %v471 = vunpack.c.l.b16 %v95
  %v472 = vunpack.c.l.b16 %v96
  %v473 = vunpack.c.l.b16 %v97
  %v474 = vunpack.c.l.b16 %v98
  %v475 = vunpack.c.l.b16 %v99
  %v476 = vunpack.c.l.b16 %v100
  %v477 = vunpack.c.l.b16 %v101
  %v478 = vunpack.c.l.b16 %v102
  %v479 = vunpack.c.l.b16 %v103
  %v480 = vunpack.c.l.b16 %v104
  %v481 = vunpack.c.l.b16 %v105
  %v482 = vunpack.c.l.b16 %v106
  %v483 = vunpack.c.l.b16 %v107
  %v484 = vunpack.c.l.b16 %v108
  %v485 = vunpack.c.l.b16 %v109
  %v486 = vunpack.c.l.b16 %v110
  %v487 = vunpack.c.l.b16 %v111
  %v488 = vunpack.c.l.b16 %v112
  %v489 = vunpack.c.l.b16 %v113
  %v490 = vunpack.c.l.b16 %v114
  %v491 = vunpack.c.l.b16 %v115
  %v492 = vunpack.c.l.b16 %v116
  %v493 = vunpack.c.l.b16 %v117
  %v494 = vunpack.c.l.b16 %v118
  %v495 = vunpack.c.l.b16 %v119
  %v496 = vunpack.c.l.b16 %v120
  %v497 = vunpack.c.l.b16 %v121
  %v498 = vunpack.c.l.b16 %v122
  %v499 = vunpack.c.l.b16 %v123
  %v500 = vunpack.c.l.b16 %v124
  %v501 = vunpack.c.l.b16 %v125
  %v502 = vunpack.c.l.b16 %v126
  %v503 = vunpack.c.l.b16 %v127
  %v504 = vunpack.c.l.b16 %v128
  %v505 = vunpack.c.l.b16 %v129
  %v506 = vunpack.c.l.b16 %v130
  %v507 = vunpack.c.l.b16 %v131
  %v508 = vunpack.c.l.b16 %v132
  %v509 = vunpack.c.l.b16 %v133
  %v510 = vunpack.c.l.b16 %v134
  %v511 = vunpack.c.l.b16 %v135
  %v512 = vunpack.c.l.b16 %v136
  %v513 = vunpack.c.l.b16 %v137
  %v514 = vunpack.c.l.b16 %v138
  %v515 = vunpack.c.l.b16 %v139
  %v516 = vunpack.c.l.b16 %v140
  %v517 = vunpack.c.l.b16 %v141
  %v518 = vunpack.c.l.b16 %v142
  %v519 = vunpack.c.l.b16 %v143
  %v520 = vunpack.c.l.b16 %v144
  %v521 = vunpack.c.l.b16 %v145
  %v522 = vunpack.c.l.b16 %v146
  %v523 = vunpack.c.l.b16 %v147
  %v524 = vunpack.c.l.b16 %v148
  %v525 = vunpack.c.l.b16 %v149
  %v526 = vunpack.c.l.b16 %v150
  %v527 = vunpack.c.l.b16 %v151
  %v528 = vunpack.c.l.b16 %v152
  %v529 = vunpack.c.l.b16 %v153
  %v530 = vunpack.c.l.b16 %v154
  %v531 = vunpack.c.l.b16 %v155
  %v532 = vunpack.c.l.b16 %v156
  %v533 = vunpack.c.l.b16 %v157
  %v534 = vunpack.c.l.b16 %v158
  %v535 = vunpack.c.l.b16 %v159
  %v536 = vunpack.c.l.b16 %v160
  %v537 = vunpack.c.l.b16 %v161
  %v538 = vunpack.c.l.b16 %v162
  %v539 = vunpack.c.l.b16 %v163
  %v540 = vpack.c.b16 %v413, %v412
  %v541 = vpack.c.b16 %v415, %v414
  %v542 = vpack.c.b16 %v417, %v416
  %v543 = vpack.c.b16 %v419, %v418
  %v544 = vpack.c.b16 %v421, %v420
  %v545 = vpack.c.b16 %v423, %v422
  %v546 = vpack.c.b16 %v425, %v424
  %v547 = vpack.c.b16 %v427, %v426
  %v548 = vpack.c.b16 %v429, %v428
  %v549 = vpack.c.b16 %v431, %v430
  %v550 = vpack.c.b16 %v433, %v432
  %v551 = vpack.c.b16 %v435, %v434
  %v552 = vpack.c.b16 %v437, %v436
  %v553 = vpack.c.b16 %v439, %v438
  %v554 = vpack.c.b16 %v441, %v440
  %v555 = vpack.c.b16 %v443, %v442
  %v556 = vpack.c.b16 %v445, %v444
  %v557 = vpack.c.b16 %v447, %v446
  %v558 = vpack.c.b16 %v449, %v448
  %v559 = vpack.c.b16 %v451, %v450
  %v560 = vpack.c.b16 %v453, %v452
  %v561 = vpack.c.b16 %v455, %v454
  %v562 = vpack.c.b16 %v457, %v456
  %v563 = vpack.c.b16 %v459, %v458
  %v564 = vpack.c.b16 %v461, %v460
  %v565 = vpack.c.b16 %v463, %v462
  %v566 = vpack.c.b16 %v465, %v464
  %v567 = vpack.c.b16 %v467, %v466
  %v568 = vpack.c.b16 %v469, %v468
  %v569 = vpack.c.b16 %v471, %v470
  %v570 = vpack.c.b16 %v473, %v472
  %v571 = vpack.c.b16 %v475, %v474
  %v572 = vpack.c.b16 %v477, %v476
  %v573 = vpack.c.b16 %v479, %v478
  %v574 = vpack.c.b16 %v481, %v480
  %v575 = vpack.c.b16 %v483, %v482
  %v576 = vpack.c.b16 %v485, %v484
  %v577 = vpack.c.b16 %v487, %v486
  %v578 = vpack.c.b16 %v489, %v488
  %v579 = vpack.c.b16 %v491, %v490
  %v580 = vpack.c.b16 %v493, %v492
  %v581 = vpack.c.b16 %v495, %v494
  %v582 = vpack.c.b16 %v497, %v496
  %v583 = vpack.c.b16 %v499, %v498
  %v584 = vpack.c.b16 %v501, %v500
  %v585 = vpack.c.b16 %v503, %v502
  %v586 = vpack.c.b16 %v505, %v504
  %v587 = vpack.c.b16 %v507, %v506
  %v588 = vpack.c.b16 %v509, %v508
  %v589 = vpack.c.b16 %v511, %v510
  %v590 = vpack.c.b16 %v513, %v512
  %v591 = vpack.c.b16 %v515, %v514
  %v592 = vpack.c.b16 %v517, %v516
  %v593 = vpack.c.b16 %v519, %v518
  %v594 = vpack.c.b16 %v521, %v520
  %v595 = vpack.c.b16 %v523, %v522
  %v596 = vpack.c.b16 %v525, %v524
  %v597 = vpack.c.b16 %v527, %v526
  %v598 = vpack.c.b16 %v529, %v528
  %v599 = vpack.c.b16 %v531, %v530
  %v600 = vpack.c.b16 %v533, %v532
  %v601 = vpack.c.b16 %v535, %v534
  %v602 = vpack.c.b16 %v537, %v536
  %v603 = vpack.c.b16 %v539, %v538
  %668 = vmatprep.subr.bf16.mxu0 0
  %669 = vmatpush1.bf16.msra.mxu0 %v540
  %670 = vmatprep.subr.bf16.mxu0 0
  %671 = vmatpush1.bf16.msra.mxu0 %v541
  %672 = vmatprep.subr.bf16.mxu0 0
  %673 = vmatpush1.bf16.msra.mxu0 %v542
  %674 = vmatprep.subr.bf16.mxu0 0
  %675 = vmatpush1.bf16.msra.mxu0 %v543
  %676 = vmatprep.subr.bf16.mxu0 0
  %677 = vmatpush1.bf16.msra.mxu0 %v544
  %678 = vmatprep.subr.bf16.mxu0 0
  %679 = vmatpush1.bf16.msra.mxu0 %v545
  %680 = vmatprep.subr.bf16.mxu0 0
  %681 = vmatpush1.bf16.msra.mxu0 %v546
  %682 = vmatprep.subr.bf16.mxu0 0
  %683 = vmatpush1.bf16.msra.mxu0 %v547
  %684 = vmatprep.subr.bf16.mxu0 0
  %685 = vmatpush1.bf16.msra.mxu0 %v548
  %686 = vmatprep.subr.bf16.mxu0 0
  %687 = vmatpush1.bf16.msra.mxu0 %v549
  %688 = vmatprep.subr.bf16.mxu0 0
  %689 = vmatpush1.bf16.msra.mxu0 %v550
  %690 = vmatprep.subr.bf16.mxu0 0
  %691 = vmatpush1.bf16.msra.mxu0 %v551
  %692 = vmatprep.subr.bf16.mxu0 0
  %693 = vmatpush1.bf16.msra.mxu0 %v552
  %694 = vmatprep.subr.bf16.mxu0 0
  %695 = vmatpush1.bf16.msra.mxu0 %v553
  %696 = vmatprep.subr.bf16.mxu0 0
  %697 = vmatpush1.bf16.msra.mxu0 %v554
  %698 = vmatprep.subr.bf16.mxu0 0
  %699 = vmatpush1.bf16.msra.mxu0 %v555
  %700 = vmatprep.mubr.bf16.mxu0 %v237
  %701 = vmatmul.mubr.bf16.gmra.mrb[0].mxu0 %v236
  %v702 = vpop.f32.mrb[0].mxu0
  %v703 = vadd.f32 0.0, %v702
  %v704 = vpop.f32.mrb[0].mxu0
  %v705 = vpop.f32.mrb[0].mxu0
  %v706 = vadd.f32 0.0, %v705
  %v707 = vpop.f32.mrb[0].mxu0
  %708 = vmatprep.mubr.bf16.mxu0 %v245
  %709 = vmatmul.mubr.bf16.gmra.mrb[0].mxu0 %v244
  %v710 = vpop.f32.mrb[0].mxu0
  %v711 = vadd.f32 0.0, %v710
  %v712 = vpop.f32.mrb[0].mxu0
  %v713 = vpop.f32.mrb[0].mxu0
  %v714 = vadd.f32 0.0, %v713
  %v715 = vpop.f32.mrb[0].mxu0
  %716 = vmatprep.mubr.bf16.mxu0 %v253
  %717 = vmatmul.mubr.bf16.gmra.mrb[0].mxu0 %v252
  %v718 = vpop.f32.mrb[0].mxu0
  %v719 = vadd.f32 0.0, %v718
  %v720 = vpop.f32.mrb[0].mxu0
  %v721 = vpop.f32.mrb[0].mxu0
  %v722 = vadd.f32 0.0, %v721
  %v723 = vpop.f32.mrb[0].mxu0
  %724 = vdwg.mxu0
  %725 = vmatprep.subr.bf16.mxu0 0
  %726 = vmatpush1.bf16.msra.mxu0 %v556
  %727 = vmatprep.subr.bf16.mxu0 0
  %728 = vmatpush1.bf16.msra.mxu0 %v557
  %729 = vmatprep.subr.bf16.mxu0 0
  %730 = vmatpush1.bf16.msra.mxu0 %v558
  %731 = vmatprep.subr.bf16.mxu0 0
  %732 = vmatpush1.bf16.msra.mxu0 %v559
  %733 = vmatprep.subr.bf16.mxu0 0
  %734 = vmatpush1.bf16.msra.mxu0 %v560
  %735 = vmatprep.subr.bf16.mxu0 0
  %736 = vmatpush1.bf16.msra.mxu0 %v561
  %737 = vmatprep.subr.bf16.mxu0 0
  %738 = vmatpush1.bf16.msra.mxu0 %v562
  %739 = vmatprep.subr.bf16.mxu0 0
  %740 = vmatpush1.bf16.msra.mxu0 %v563
  %741 = vmatprep.subr.bf16.mxu0 0
  %742 = vmatpush1.bf16.msra.mxu0 %v564
  %743 = vmatprep.subr.bf16.mxu0 0
  %744 = vmatpush1.bf16.msra.mxu0 %v565
  %745 = vmatprep.subr.bf16.mxu0 0
  %746 = vmatpush1.bf16.msra.mxu0 %v566
  %747 = vmatprep.subr.bf16.mxu0 0
  %748 = vmatpush1.bf16.msra.mxu0 %v567
  %749 = vmatprep.subr.bf16.mxu0 0
  %750 = vmatpush1.bf16.msra.mxu0 %v568
  %751 = vmatprep.subr.bf16.mxu0 0
  %752 = vmatpush1.bf16.msra.mxu0 %v569
  %753 = vmatprep.subr.bf16.mxu0 0
  %754 = vmatpush1.bf16.msra.mxu0 %v570
  %755 = vmatprep.subr.bf16.mxu0 0
  %756 = vmatpush1.bf16.msra.mxu0 %v571
  %757 = vmatprep.mubr.bf16.mxu0 %v239
  %758 = vmatmul.mubr.bf16.gmra.mrb[0].mxu0 %v238
  %v759 = vpop.f32.mrb[0].mxu0
  %v760 = vadd.f32 %v703, %v759
  %v761 = vpop.f32.mrb[0].mxu0
  %v762 = vpop.f32.mrb[0].mxu0
  %v763 = vadd.f32 %v706, %v762
  %v764 = vpop.f32.mrb[0].mxu0
  %765 = vmatprep.mubr.bf16.mxu0 %v247
  %766 = vmatmul.mubr.bf16.gmra.mrb[0].mxu0 %v246
  %v767 = vpop.f32.mrb[0].mxu0
  %v768 = vadd.f32 %v711, %v767
  %v769 = vpop.f32.mrb[0].mxu0
  %v770 = vpop.f32.mrb[0].mxu0
  %v771 = vadd.f32 %v714, %v770
  %v772 = vpop.f32.mrb[0].mxu0
  %773 = vmatprep.mubr.bf16.mxu0 %v255
  %774 = vmatmul.mubr.bf16.gmra.mrb[0].mxu0 %v254
  %v775 = vpop.f32.mrb[0].mxu0
  %v776 = vadd.f32 %v719, %v775
  %v777 = vpop.f32.mrb[0].mxu0
  %v778 = vpop.f32.mrb[0].mxu0
  %v779 = vadd.f32 %v722, %v778
  %v780 = vpop.f32.mrb[0].mxu0
  %781 = vdwg.mxu0
  %782 = vmatprep.subr.bf16.mxu0 0
  %783 = vmatpush1.bf16.msra.mxu0 %v572
  %784 = vmatprep.subr.bf16.mxu0 0
  %785 = vmatpush1.bf16.msra.mxu0 %v573
  %786 = vmatprep.subr.bf16.mxu0 0
  %787 = vmatpush1.bf16.msra.mxu0 %v574
  %788 = vmatprep.subr.bf16.mxu0 0
  %789 = vmatpush1.bf16.msra.mxu0 %v575
  %790 = vmatprep.subr.bf16.mxu0 0
  %791 = vmatpush1.bf16.msra.mxu0 %v576
  %792 = vmatprep.subr.bf16.mxu0 0
  %793 = vmatpush1.bf16.msra.mxu0 %v577
  %794 = vmatprep.subr.bf16.mxu0 0
  %795 = vmatpush1.bf16.msra.mxu0 %v578
  %796 = vmatprep.subr.bf16.mxu0 0
  %797 = vmatpush1.bf16.msra.mxu0 %v579
  %798 = vmatprep.subr.bf16.mxu0 0
  %799 = vmatpush1.bf16.msra.mxu0 %v580
  %800 = vmatprep.subr.bf16.mxu0 0
  %801 = vmatpush1.bf16.msra.mxu0 %v581
  %802 = vmatprep.subr.bf16.mxu0 0
  %803 = vmatpush1.bf16.msra.mxu0 %v582
  %804 = vmatprep.subr.bf16.mxu0 0
  %805 = vmatpush1.bf16.msra.mxu0 %v583
  %806 = vmatprep.subr.bf16.mxu0 0
  %807 = vmatpush1.bf16.msra.mxu0 %v584
  %808 = vmatprep.subr.bf16.mxu0 0
  %809 = vmatpush1.bf16.msra.mxu0 %v585
  %810 = vmatprep.subr.bf16.mxu0 0
  %811 = vmatpush1.bf16.msra.mxu0 %v586
  %812 = vmatprep.subr.bf16.mxu0 0
  %813 = vmatpush1.bf16.msra.mxu0 %v587
  %814 = vmatprep.mubr.bf16.mxu0 %v241
  %815 = vmatmul.mubr.bf16.gmra.mrb[0].mxu0 %v240
  %v816 = vpop.f32.mrb[0].mxu0
  %v817 = vadd.f32 %v760, %v816
  %v818 = vpop.f32.mrb[0].mxu0
  %v819 = vpop.f32.mrb[0].mxu0
  %v820 = vadd.f32 %v763, %v819
  %v821 = vpop.f32.mrb[0].mxu0
  %822 = vmatprep.mubr.bf16.mxu0 %v249
  %823 = vmatmul.mubr.bf16.gmra.mrb[0].mxu0 %v248
  %v824 = vpop.f32.mrb[0].mxu0
  %v825 = vadd.f32 %v768, %v824
  %v826 = vpop.f32.mrb[0].mxu0
  %v827 = vpop.f32.mrb[0].mxu0
  %v828 = vadd.f32 %v771, %v827
  %v829 = vpop.f32.mrb[0].mxu0
  %830 = vmatprep.mubr.bf16.mxu0 %v257
  %831 = vmatmul.mubr.bf16.gmra.mrb[0].mxu0 %v256
  %v832 = vpop.f32.mrb[0].mxu0
  %v833 = vadd.f32 %v776, %v832
  %v834 = vpop.f32.mrb[0].mxu0
  %v835 = vpop.f32.mrb[0].mxu0
  %v836 = vadd.f32 %v779, %v835
  %v837 = vpop.f32.mrb[0].mxu0
  %838 = vdwg.mxu0
  %839 = vmatprep.subr.bf16.mxu0 0
  %840 = vmatpush1.bf16.msra.mxu0 %v588
  %841 = vmatprep.subr.bf16.mxu0 0
  %842 = vmatpush1.bf16.msra.mxu0 %v589
  %843 = vmatprep.subr.bf16.mxu0 0
  %844 = vmatpush1.bf16.msra.mxu0 %v590
  %845 = vmatprep.subr.bf16.mxu0 0
  %846 = vmatpush1.bf16.msra.mxu0 %v591
  %847 = vmatprep.subr.bf16.mxu0 0
  %848 = vmatpush1.bf16.msra.mxu0 %v592
  %849 = vmatprep.subr.bf16.mxu0 0
  %850 = vmatpush1.bf16.msra.mxu0 %v593
  %851 = vmatprep.subr.bf16.mxu0 0
  %852 = vmatpush1.bf16.msra.mxu0 %v594
  %853 = vmatprep.subr.bf16.mxu0 0
  %854 = vmatpush1.bf16.msra.mxu0 %v595
  %855 = vmatprep.subr.bf16.mxu0 0
  %856 = vmatpush1.bf16.msra.mxu0 %v596
  %857 = vmatprep.subr.bf16.mxu0 0
  %858 = vmatpush1.bf16.msra.mxu0 %v597
  %859 = vmatprep.subr.bf16.mxu0 0
  %860 = vmatpush1.bf16.msra.mxu0 %v598
  %861 = vmatprep.subr.bf16.mxu0 0
  %862 = vmatpush1.bf16.msra.mxu0 %v599
  %863 = vmatprep.subr.bf16.mxu0 0
  %864 = vmatpush1.bf16.msra.mxu0 %v600
  %865 = vmatprep.subr.bf16.mxu0 0
  %866 = vmatpush1.bf16.msra.mxu0 %v601
  %867 = vmatprep.subr.bf16.mxu0 0
  %868 = vmatpush1.bf16.msra.mxu0 %v602
  %869 = vmatprep.subr.bf16.mxu0 0
  %870 = vmatpush1.bf16.msra.mxu0 %v603
  %871 = vmatprep.mubr.bf16.mxu0 %v243
  %872 = vmatmul.mubr.bf16.gmra.mrb[0].mxu0 %v242
  %v873 = vpop.f32.mrb[0].mxu0
  %v874 = vadd.f32 %v817, %v873
  %v875 = vpop.f32.mrb[0].mxu0
  %v876 = vpop.f32.mrb[0].mxu0
  %v877 = vadd.f32 %v820, %v876
  %v878 = vpop.f32.mrb[0].mxu0
  %879 = vmatprep.mubr.bf16.mxu0 %v251
  %880 = vmatmul.mubr.bf16.gmra.mrb[0].mxu0 %v250
  %v881 = vpop.f32.mrb[0].mxu0
  %v882 = vadd.f32 %v825, %v881
  %v883 = vpop.f32.mrb[0].mxu0
  %v884 = vpop.f32.mrb[0].mxu0
  %v885 = vadd.f32 %v828, %v884
  %v886 = vpop.f32.mrb[0].mxu0
  %887 = vmatprep.mubr.bf16.mxu0 %v259
  %888 = vmatmul.mubr.bf16.gmra.mrb[0].mxu0 %v258
  %v889 = vpop.f32.mrb[0].mxu0
  %v890 = vadd.f32 %v833, %v889
  %v891 = vpop.f32.mrb[0].mxu0
  %v892 = vpop.f32.mrb[0].mxu0
  %v893 = vadd.f32 %v836, %v892
  %v894 = vpop.f32.mrb[0].mxu0
  %895 = vdwg.mxu0
  %vm896 = vcmask 523264
  %897 = vst.msk [vmem:[%s2] sm:$0xff] %vm896, %v874
  %898 = vst.msk [vmem:[%s2 + $0x8] sm:$0xff] %vm896, %v877
  %899 = vst.msk [vmem:[%s2 + $0x10] sm:$0xff] %vm896, %v882
  %900 = vst.msk [vmem:[%s2 + $0x18] sm:$0xff] %vm896, %v885
  %901 = vst.msk [vmem:[%s2 + $0x20] sm:$0xff] %vm896, %v890
  %vm902 = vcmask 520192
  %903 = vst.msk [vmem:[%s2 + $0x28] sm:$0x1f] %vm902, %v893
  %s904 = scalar_lea.vmem %s0, 512
  %v905 = vld [vmem:[%s904] sm:$0xf]
  %v906 = vld [vmem:[%s904 + $0x4] sm:$0xf]
  %v907 = vld [vmem:[%s904 + $0x8] sm:$0xf]
  %v908 = vld [vmem:[%s904 + $0xc] sm:$0xf]
  %v909 = vld [vmem:[%s904 + $0x10] sm:$0xf]
  %v910 = vld [vmem:[%s904 + $0x14] sm:$0xf]
  %v911 = vld [vmem:[%s904 + $0x18] sm:$0xf]
  %v912 = vld [vmem:[%s904 + $0x1c] sm:$0xf]
  %v913 = vld [vmem:[%s904 + $0x20] sm:$0xf]
  %v914 = vld [vmem:[%s904 + $0x24] sm:$0xf]
  %v915 = vld [vmem:[%s904 + $0x28] sm:$0xf]
  %v916 = vld [vmem:[%s904 + $0x2c] sm:$0xf]
  %v917 = vld [vmem:[%s904 + $0x30] sm:$0xf]
  %v918 = vld [vmem:[%s904 + $0x34] sm:$0xf]
  %v919 = vld [vmem:[%s904 + $0x38] sm:$0xf]
  %v920 = vld [vmem:[%s904 + $0x3c] sm:$0xf]
  %v921 = vld [vmem:[%s904 + $0x40] sm:$0xf]
  %v922 = vld [vmem:[%s904 + $0x44] sm:$0xf]
  %v923 = vld [vmem:[%s904 + $0x48] sm:$0xf]
  %v924 = vld [vmem:[%s904 + $0x4c] sm:$0xf]
  %v925 = vld [vmem:[%s904 + $0x50] sm:$0xf]
  %v926 = vld [vmem:[%s904 + $0x54] sm:$0xf]
  %v927 = vld [vmem:[%s904 + $0x58] sm:$0xf]
  %v928 = vld [vmem:[%s904 + $0x5c] sm:$0xf]
  %v929 = vld [vmem:[%s904 + $0x60] sm:$0xf]
  %v930 = vld [vmem:[%s904 + $0x64] sm:$0xf]
  %v931 = vld [vmem:[%s904 + $0x68] sm:$0xf]
  %v932 = vld [vmem:[%s904 + $0x6c] sm:$0xf]
  %v933 = vld [vmem:[%s904 + $0x70] sm:$0xf]
  %v934 = vld [vmem:[%s904 + $0x74] sm:$0xf]
  %v935 = vld [vmem:[%s904 + $0x78] sm:$0xf]
  %v936 = vld [vmem:[%s904 + $0x7c] sm:$0xf]
  %v937 = vld [vmem:[%s904 + $0x80] sm:$0xf]
  %v938 = vld [vmem:[%s904 + $0x84] sm:$0xf]
  %v939 = vld [vmem:[%s904 + $0x88] sm:$0xf]
  %v940 = vld [vmem:[%s904 + $0x8c] sm:$0xf]
  %v941 = vld [vmem:[%s904 + $0x90] sm:$0xf]
  %v942 = vld [vmem:[%s904 + $0x94] sm:$0xf]
  %v943 = vld [vmem:[%s904 + $0x98] sm:$0xf]
  %v944 = vld [vmem:[%s904 + $0x9c] sm:$0xf]
  %v945 = vld [vmem:[%s904 + $0xa0] sm:$0xf]
  %v946 = vld [vmem:[%s904 + $0xa4] sm:$0xf]
  %v947 = vld [vmem:[%s904 + $0xa8] sm:$0xf]
  %v948 = vld [vmem:[%s904 + $0xac] sm:$0xf]
  %v949 = vld [vmem:[%s904 + $0xb0] sm:$0xf]
  %v950 = vld [vmem:[%s904 + $0xb4] sm:$0xf]
  %v951 = vld [vmem:[%s904 + $0xb8] sm:$0xf]
  %v952 = vld [vmem:[%s904 + $0xbc] sm:$0xf]
  %v953 = vld [vmem:[%s904 + $0xc0] sm:$0xf]
  %v954 = vld [vmem:[%s904 + $0xc4] sm:$0xf]
  %v955 = vld [vmem:[%s904 + $0xc8] sm:$0xf]
  %v956 = vld [vmem:[%s904 + $0xcc] sm:$0xf]
  %v957 = vld [vmem:[%s904 + $0xd0] sm:$0xf]
  %v958 = vld [vmem:[%s904 + $0xd4] sm:$0xf]
  %v959 = vld [vmem:[%s904 + $0xd8] sm:$0xf]
  %v960 = vld [vmem:[%s904 + $0xdc] sm:$0xf]
  %v961 = vld [vmem:[%s904 + $0xe0] sm:$0xf]
  %v962 = vld [vmem:[%s904 + $0xe4] sm:$0xf]
  %v963 = vld [vmem:[%s904 + $0xe8] sm:$0xf]
  %v964 = vld [vmem:[%s904 + $0xec] sm:$0xf]
  %v965 = vld [vmem:[%s904 + $0xf0] sm:$0xf]
  %v966 = vld [vmem:[%s904 + $0xf4] sm:$0xf]
  %v967 = vld [vmem:[%s904 + $0xf8] sm:$0xf]
  %v968 = vld [vmem:[%s904 + $0xfc] sm:$0xf]
  %v969 = vld [vmem:[%s904 + $0x100] sm:$0xf]
  %v970 = vld [vmem:[%s904 + $0x104] sm:$0xf]
  %v971 = vld [vmem:[%s904 + $0x108] sm:$0xf]
  %v972 = vld [vmem:[%s904 + $0x10c] sm:$0xf]
  %v973 = vld [vmem:[%s904 + $0x110] sm:$0xf]
  %v974 = vld [vmem:[%s904 + $0x114] sm:$0xf]
  %v975 = vld [vmem:[%s904 + $0x118] sm:$0xf]
  %v976 = vld [vmem:[%s904 + $0x11c] sm:$0xf]
  %v977 = vld [vmem:[%s904 + $0x120] sm:$0xf]
  %v978 = vld [vmem:[%s904 + $0x124] sm:$0xf]
  %v979 = vld [vmem:[%s904 + $0x128] sm:$0xf]
  %v980 = vld [vmem:[%s904 + $0x12c] sm:$0xf]
  %v981 = vld [vmem:[%s904 + $0x130] sm:$0xf]
  %v982 = vld [vmem:[%s904 + $0x134] sm:$0xf]
  %v983 = vld [vmem:[%s904 + $0x138] sm:$0xf]
  %v984 = vld [vmem:[%s904 + $0x13c] sm:$0xf]
  %v985 = vld [vmem:[%s904 + $0x140] sm:$0xf]
  %v986 = vld [vmem:[%s904 + $0x144] sm:$0xf]
  %v987 = vld [vmem:[%s904 + $0x148] sm:$0xf]
  %v988 = vld [vmem:[%s904 + $0x14c] sm:$0xf]
  %v989 = vld [vmem:[%s904 + $0x150] sm:$0xf]
  %v990 = vld [vmem:[%s904 + $0x154] sm:$0xf]
  %v991 = vld [vmem:[%s904 + $0x158] sm:$0xf]
  %v992 = vld [vmem:[%s904 + $0x15c] sm:$0xf]
  %v993 = vld [vmem:[%s904 + $0x160] sm:$0xf]
  %v994 = vld [vmem:[%s904 + $0x164] sm:$0xf]
  %v995 = vld [vmem:[%s904 + $0x168] sm:$0xf]
  %v996 = vld [vmem:[%s904 + $0x16c] sm:$0xf]
  %v997 = vld [vmem:[%s904 + $0x170] sm:$0xf]
  %v998 = vld [vmem:[%s904 + $0x174] sm:$0xf]
  %v999 = vld [vmem:[%s904 + $0x178] sm:$0xf]
  %v1000 = vld [vmem:[%s904 + $0x17c] sm:$0xf]
  %v1001 = vld [vmem:[%s904 + $0x180] sm:$0xf]
  %v1002 = vld [vmem:[%s904 + $0x184] sm:$0xf]
  %v1003 = vld [vmem:[%s904 + $0x188] sm:$0xf]
  %v1004 = vld [vmem:[%s904 + $0x18c] sm:$0xf]
  %v1005 = vld [vmem:[%s904 + $0x190] sm:$0xf]
  %v1006 = vld [vmem:[%s904 + $0x194] sm:$0xf]
  %v1007 = vld [vmem:[%s904 + $0x198] sm:$0xf]
  %v1008 = vld [vmem:[%s904 + $0x19c] sm:$0xf]
  %v1009 = vld [vmem:[%s904 + $0x1a0] sm:$0xf]
  %v1010 = vld [vmem:[%s904 + $0x1a4] sm:$0xf]
  %v1011 = vld [vmem:[%s904 + $0x1a8] sm:$0xf]
  %v1012 = vld [vmem:[%s904 + $0x1ac] sm:$0xf]
  %v1013 = vld [vmem:[%s904 + $0x1b0] sm:$0xf]
  %v1014 = vld [vmem:[%s904 + $0x1b4] sm:$0xf]
  %v1015 = vld [vmem:[%s904 + $0x1b8] sm:$0xf]
  %v1016 = vld [vmem:[%s904 + $0x1bc] sm:$0xf]
  %v1017 = vld [vmem:[%s904 + $0x1c0] sm:$0xf]
  %v1018 = vld [vmem:[%s904 + $0x1c4] sm:$0xf]
  %v1019 = vld [vmem:[%s904 + $0x1c8] sm:$0xf]
  %v1020 = vld [vmem:[%s904 + $0x1cc] sm:$0xf]
  %v1021 = vld [vmem:[%s904 + $0x1d0] sm:$0xf]
  %v1022 = vld [vmem:[%s904 + $0x1d4] sm:$0xf]
  %v1023 = vld [vmem:[%s904 + $0x1d8] sm:$0xf]
  %v1024 = vld [vmem:[%s904 + $0x1dc] sm:$0xf]
  %v1025 = vld [vmem:[%s904 + $0x1e0] sm:$0xf]
  %v1026 = vld [vmem:[%s904 + $0x1e4] sm:$0xf]
  %v1027 = vld [vmem:[%s904 + $0x1e8] sm:$0xf]
  %v1028 = vld [vmem:[%s904 + $0x1ec] sm:$0xf]
  %v1029 = vld [vmem:[%s904 + $0x1f0] sm:$0xf]
  %v1030 = vld [vmem:[%s904 + $0x1f4] sm:$0xf]
  %v1031 = vld [vmem:[%s904 + $0x1f8] sm:$0xf]
  %v1032 = vld [vmem:[%s904 + $0x1fc] sm:$0xf]
  %v1161 = vunpack.c.l.b16 %v905
  %v1162 = vunpack.c.l.b16 %v906
  %v1163 = vunpack.c.l.b16 %v907
  %v1164 = vunpack.c.l.b16 %v908
  %v1165 = vunpack.c.l.b16 %v909
  %v1166 = vunpack.c.l.b16 %v910
  %v1167 = vunpack.c.l.b16 %v911
  %v1168 = vunpack.c.l.b16 %v912
  %v1169 = vunpack.c.l.b16 %v913
  %v1170 = vunpack.c.l.b16 %v914
  %v1171 = vunpack.c.l.b16 %v915
  %v1172 = vunpack.c.l.b16 %v916
  %v1173 = vunpack.c.l.b16 %v917
  %v1174 = vunpack.c.l.b16 %v918
  %v1175 = vunpack.c.l.b16 %v919
  %v1176 = vunpack.c.l.b16 %v920
  %v1177 = vunpack.c.l.b16 %v921
  %v1178 = vunpack.c.l.b16 %v922
  %v1179 = vunpack.c.l.b16 %v923
  %v1180 = vunpack.c.l.b16 %v924
  %v1181 = vunpack.c.l.b16 %v925
  %v1182 = vunpack.c.l.b16 %v926
  %v1183 = vunpack.c.l.b16 %v927
  %v1184 = vunpack.c.l.b16 %v928
  %v1185 = vunpack.c.l.b16 %v929
  %v1186 = vunpack.c.l.b16 %v930
  %v1187 = vunpack.c.l.b16 %v931
  %v1188 = vunpack.c.l.b16 %v932
  %v1189 = vunpack.c.l.b16 %v933
  %v1190 = vunpack.c.l.b16 %v934
  %v1191 = vunpack.c.l.b16 %v935
  %v1192 = vunpack.c.l.b16 %v936
  %v1193 = vunpack.c.l.b16 %v937
  %v1194 = vunpack.c.l.b16 %v938
  %v1195 = vunpack.c.l.b16 %v939
  %v1196 = vunpack.c.l.b16 %v940
  %v1197 = vunpack.c.l.b16 %v941
  %v1198 = vunpack.c.l.b16 %v942
  %v1199 = vunpack.c.l.b16 %v943
  %v1200 = vunpack.c.l.b16 %v944
  %v1201 = vunpack.c.l.b16 %v945
  %v1202 = vunpack.c.l.b16 %v946
  %v1203 = vunpack.c.l.b16 %v947
  %v1204 = vunpack.c.l.b16 %v948
  %v1205 = vunpack.c.l.b16 %v949
  %v1206 = vunpack.c.l.b16 %v950
  %v1207 = vunpack.c.l.b16 %v951
  %v1208 = vunpack.c.l.b16 %v952
  %v1209 = vunpack.c.l.b16 %v953
  %v1210 = vunpack.c.l.b16 %v954
  %v1211 = vunpack.c.l.b16 %v955
  %v1212 = vunpack.c.l.b16 %v956
  %v1213 = vunpack.c.l.b16 %v957
  %v1214 = vunpack.c.l.b16 %v958
  %v1215 = vunpack.c.l.b16 %v959
  %v1216 = vunpack.c.l.b16 %v960
  %v1217 = vunpack.c.l.b16 %v961
  %v1218 = vunpack.c.l.b16 %v962
  %v1219 = vunpack.c.l.b16 %v963
  %v1220 = vunpack.c.l.b16 %v964
  %v1221 = vunpack.c.l.b16 %v965
  %v1222 = vunpack.c.l.b16 %v966
  %v1223 = vunpack.c.l.b16 %v967
  %v1224 = vunpack.c.l.b16 %v968
  %v1225 = vunpack.c.l.b16 %v969
  %v1226 = vunpack.c.l.b16 %v970
  %v1227 = vunpack.c.l.b16 %v971
  %v1228 = vunpack.c.l.b16 %v972
  %v1229 = vunpack.c.l.b16 %v973
  %v1230 = vunpack.c.l.b16 %v974
  %v1231 = vunpack.c.l.b16 %v975
  %v1232 = vunpack.c.l.b16 %v976
  %v1233 = vunpack.c.l.b16 %v977
  %v1234 = vunpack.c.l.b16 %v978
  %v1235 = vunpack.c.l.b16 %v979
  %v1236 = vunpack.c.l.b16 %v980
  %v1237 = vunpack.c.l.b16 %v981
  %v1238 = vunpack.c.l.b16 %v982
  %v1239 = vunpack.c.l.b16 %v983
  %v1240 = vunpack.c.l.b16 %v984
  %v1241 = vunpack.c.l.b16 %v985
  %v1242 = vunpack.c.l.b16 %v986
  %v1243 = vunpack.c.l.b16 %v987
  %v1244 = vunpack.c.l.b16 %v988
  %v1245 = vunpack.c.l.b16 %v989
  %v1246 = vunpack.c.l.b16 %v990
  %v1247 = vunpack.c.l.b16 %v991
  %v1248 = vunpack.c.l.b16 %v992
  %v1249 = vunpack.c.l.b16 %v993
  %v1250 = vunpack.c.l.b16 %v994
  %v1251 = vunpack.c.l.b16 %v995
  %v1252 = vunpack.c.l.b16 %v996
  %v1253 = vunpack.c.l.b16 %v997
  %v1254 = vunpack.c.l.b16 %v998
  %v1255 = vunpack.c.l.b16 %v999
  %v1256 = vunpack.c.l.b16 %v1000
  %v1257 = vunpack.c.l.b16 %v1001
  %v1258 = vunpack.c.l.b16 %v1002
  %v1259 = vunpack.c.l.b16 %v1003
  %v1260 = vunpack.c.l.b16 %v1004
  %v1261 = vunpack.c.l.b16 %v1005
  %v1262 = vunpack.c.l.b16 %v1006
  %v1263 = vunpack.c.l.b16 %v1007
  %v1264 = vunpack.c.l.b16 %v1008
  %v1265 = vunpack.c.l.b16 %v1009
  %v1266 = vunpack.c.l.b16 %v1010
  %v1267 = vunpack.c.l.b16 %v1011
  %v1268 = vunpack.c.l.b16 %v1012
  %v1269 = vunpack.c.l.b16 %v1013
  %v1270 = vunpack.c.l.b16 %v1014
  %v1271 = vunpack.c.l.b16 %v1015
  %v1272 = vunpack.c.l.b16 %v1016
  %v1273 = vunpack.c.l.b16 %v1017
  %v1274 = vunpack.c.l.b16 %v1018
  %v1275 = vunpack.c.l.b16 %v1019
  %v1276 = vunpack.c.l.b16 %v1020
  %v1277 = vunpack.c.l.b16 %v1021
  %v1278 = vunpack.c.l.b16 %v1022
  %v1279 = vunpack.c.l.b16 %v1023
  %v1280 = vunpack.c.l.b16 %v1024
  %v1281 = vunpack.c.l.b16 %v1025
  %v1282 = vunpack.c.l.b16 %v1026
  %v1283 = vunpack.c.l.b16 %v1027
  %v1284 = vunpack.c.l.b16 %v1028
  %v1285 = vunpack.c.l.b16 %v1029
  %v1286 = vunpack.c.l.b16 %v1030
  %v1287 = vunpack.c.l.b16 %v1031
  %v1288 = vunpack.c.l.b16 %v1032
  %v1289 = vpack.c.b16 %v1162, %v1161
  %v1290 = vpack.c.b16 %v1164, %v1163
  %v1291 = vpack.c.b16 %v1166, %v1165
  %v1292 = vpack.c.b16 %v1168, %v1167
  %v1293 = vpack.c.b16 %v1170, %v1169
  %v1294 = vpack.c.b16 %v1172, %v1171
  %v1295 = vpack.c.b16 %v1174, %v1173
  %v1296 = vpack.c.b16 %v1176, %v1175
  %v1297 = vpack.c.b16 %v1178, %v1177
  %v1298 = vpack.c.b16 %v1180, %v1179
  %v1299 = vpack.c.b16 %v1182, %v1181
  %v1300 = vpack.c.b16 %v1184, %v1183
  %v1301 = vpack.c.b16 %v1186, %v1185
  %v1302 = vpack.c.b16 %v1188, %v1187
  %v1303 = vpack.c.b16 %v1190, %v1189
  %v1304 = vpack.c.b16 %v1192, %v1191
  %v1305 = vpack.c.b16 %v1194, %v1193
  %v1306 = vpack.c.b16 %v1196, %v1195
  %v1307 = vpack.c.b16 %v1198, %v1197
  %v1308 = vpack.c.b16 %v1200, %v1199
  %v1309 = vpack.c.b16 %v1202, %v1201
  %v1310 = vpack.c.b16 %v1204, %v1203
  %v1311 = vpack.c.b16 %v1206, %v1205
  %v1312 = vpack.c.b16 %v1208, %v1207
  %v1313 = vpack.c.b16 %v1210, %v1209
  %v1314 = vpack.c.b16 %v1212, %v1211
  %v1315 = vpack.c.b16 %v1214, %v1213
  %v1316 = vpack.c.b16 %v1216, %v1215
  %v1317 = vpack.c.b16 %v1218, %v1217
  %v1318 = vpack.c.b16 %v1220, %v1219
  %v1319 = vpack.c.b16 %v1222, %v1221
  %v1320 = vpack.c.b16 %v1224, %v1223
  %v1321 = vpack.c.b16 %v1226, %v1225
  %v1322 = vpack.c.b16 %v1228, %v1227
  %v1323 = vpack.c.b16 %v1230, %v1229
  %v1324 = vpack.c.b16 %v1232, %v1231
  %v1325 = vpack.c.b16 %v1234, %v1233
  %v1326 = vpack.c.b16 %v1236, %v1235
  %v1327 = vpack.c.b16 %v1238, %v1237
  %v1328 = vpack.c.b16 %v1240, %v1239
  %v1329 = vpack.c.b16 %v1242, %v1241
  %v1330 = vpack.c.b16 %v1244, %v1243
  %v1331 = vpack.c.b16 %v1246, %v1245
  %v1332 = vpack.c.b16 %v1248, %v1247
  %v1333 = vpack.c.b16 %v1250, %v1249
  %v1334 = vpack.c.b16 %v1252, %v1251
  %v1335 = vpack.c.b16 %v1254, %v1253
  %v1336 = vpack.c.b16 %v1256, %v1255
  %v1337 = vpack.c.b16 %v1258, %v1257
  %v1338 = vpack.c.b16 %v1260, %v1259
  %v1339 = vpack.c.b16 %v1262, %v1261
  %v1340 = vpack.c.b16 %v1264, %v1263
  %v1341 = vpack.c.b16 %v1266, %v1265
  %v1342 = vpack.c.b16 %v1268, %v1267
  %v1343 = vpack.c.b16 %v1270, %v1269
  %v1344 = vpack.c.b16 %v1272, %v1271
  %v1345 = vpack.c.b16 %v1274, %v1273
  %v1346 = vpack.c.b16 %v1276, %v1275
  %v1347 = vpack.c.b16 %v1278, %v1277
  %v1348 = vpack.c.b16 %v1280, %v1279
  %v1349 = vpack.c.b16 %v1282, %v1281
  %v1350 = vpack.c.b16 %v1284, %v1283
  %v1351 = vpack.c.b16 %v1286, %v1285
  %v1352 = vpack.c.b16 %v1288, %v1287
  %1417 = vmatprep.subr.bf16.mxu0 0
  %1418 = vmatpush1.bf16.msra.mxu0 %v1289
  %1419 = vmatprep.subr.bf16.mxu0 0
  %1420 = vmatpush1.bf16.msra.mxu0 %v1290
  %1421 = vmatprep.subr.bf16.mxu0 0
  %1422 = vmatpush1.bf16.msra.mxu0 %v1291
  %1423 = vmatprep.subr.bf16.mxu0 0
  %1424 = vmatpush1.bf16.msra.mxu0 %v1292
  %1425 = vmatprep.subr.bf16.mxu0 0
  %1426 = vmatpush1.bf16.msra.mxu0 %v1293
  %1427 = vmatprep.subr.bf16.mxu0 0
  %1428 = vmatpush1.bf16.msra.mxu0 %v1294
  %1429 = vmatprep.subr.bf16.mxu0 0
  %1430 = vmatpush1.bf16.msra.mxu0 %v1295
  %1431 = vmatprep.subr.bf16.mxu0 0
  %1432 = vmatpush1.bf16.msra.mxu0 %v1296
  %1433 = vmatprep.subr.bf16.mxu0 0
  %1434 = vmatpush1.bf16.msra.mxu0 %v1297
  %1435 = vmatprep.subr.bf16.mxu0 0
  %1436 = vmatpush1.bf16.msra.mxu0 %v1298
  %1437 = vmatprep.subr.bf16.mxu0 0
  %1438 = vmatpush1.bf16.msra.mxu0 %v1299
  %1439 = vmatprep.subr.bf16.mxu0 0
  %1440 = vmatpush1.bf16.msra.mxu0 %v1300
  %1441 = vmatprep.subr.bf16.mxu0 0
  %1442 = vmatpush1.bf16.msra.mxu0 %v1301
  %1443 = vmatprep.subr.bf16.mxu0 0
  %1444 = vmatpush1.bf16.msra.mxu0 %v1302
  %1445 = vmatprep.subr.bf16.mxu0 0
  %1446 = vmatpush1.bf16.msra.mxu0 %v1303
  %1447 = vmatprep.subr.bf16.mxu0 0
  %1448 = vmatpush1.bf16.msra.mxu0 %v1304
  %1449 = vmatprep.mubr.bf16.mxu0 %v237
  %1450 = vmatmul.mubr.bf16.gmra.mrb[0].mxu0 %v236
  %v1451 = vpop.f32.mrb[0].mxu0
  %v1452 = vadd.f32 0.0, %v1451
  %v1453 = vpop.f32.mrb[0].mxu0
  %v1454 = vpop.f32.mrb[0].mxu0
  %v1455 = vadd.f32 0.0, %v1454
  %v1456 = vpop.f32.mrb[0].mxu0
  %1457 = vmatprep.mubr.bf16.mxu0 %v245
  %1458 = vmatmul.mubr.bf16.gmra.mrb[0].mxu0 %v244
  %v1459 = vpop.f32.mrb[0].mxu0
  %v1460 = vadd.f32 0.0, %v1459
  %v1461 = vpop.f32.mrb[0].mxu0
  %v1462 = vpop.f32.mrb[0].mxu0
  %v1463 = vadd.f32 0.0, %v1462
  %v1464 = vpop.f32.mrb[0].mxu0
  %1465 = vmatprep.mubr.bf16.mxu0 %v253
  %1466 = vmatmul.mubr.bf16.gmra.mrb[0].mxu0 %v252
  %v1467 = vpop.f32.mrb[0].mxu0
  %v1468 = vadd.f32 0.0, %v1467
  %v1469 = vpop.f32.mrb[0].mxu0
  %v1470 = vpop.f32.mrb[0].mxu0
  %v1471 = vadd.f32 0.0, %v1470
  %v1472 = vpop.f32.mrb[0].mxu0
  %1473 = vdwg.mxu0
  %1474 = vmatprep.subr.bf16.mxu0 0
  %1475 = vmatpush1.bf16.msra.mxu0 %v1305
  %1476 = vmatprep.subr.bf16.mxu0 0
  %1477 = vmatpush1.bf16.msra.mxu0 %v1306
  %1478 = vmatprep.subr.bf16.mxu0 0
  %1479 = vmatpush1.bf16.msra.mxu0 %v1307
  %1480 = vmatprep.subr.bf16.mxu0 0
  %1481 = vmatpush1.bf16.msra.mxu0 %v1308
  %1482 = vmatprep.subr.bf16.mxu0 0
  %1483 = vmatpush1.bf16.msra.mxu0 %v1309
  %1484 = vmatprep.subr.bf16.mxu0 0
  %1485 = vmatpush1.bf16.msra.mxu0 %v1310
  %1486 = vmatprep.subr.bf16.mxu0 0
  %1487 = vmatpush1.bf16.msra.mxu0 %v1311
  %1488 = vmatprep.subr.bf16.mxu0 0
  %1489 = vmatpush1.bf16.msra.mxu0 %v1312
  %1490 = vmatprep.subr.bf16.mxu0 0
  %1491 = vmatpush1.bf16.msra.mxu0 %v1313
  %1492 = vmatprep.subr.bf16.mxu0 0
  %1493 = vmatpush1.bf16.msra.mxu0 %v1314
  %1494 = vmatprep.subr.bf16.mxu0 0
  %1495 = vmatpush1.bf16.msra.mxu0 %v1315
  %1496 = vmatprep.subr.bf16.mxu0 0
  %1497 = vmatpush1.bf16.msra.mxu0 %v1316
  %1498 = vmatprep.subr.bf16.mxu0 0
  %1499 = vmatpush1.bf16.msra.mxu0 %v1317
  %1500 = vmatprep.subr.bf16.mxu0 0
  %1501 = vmatpush1.bf16.msra.mxu0 %v1318
  %1502 = vmatprep.subr.bf16.mxu0 0
  %1503 = vmatpush1.bf16.msra.mxu0 %v1319
  %1504 = vmatprep.subr.bf16.mxu0 0
  %1505 = vmatpush1.bf16.msra.mxu0 %v1320
  %1506 = vmatprep.mubr.bf16.mxu0 %v239
  %1507 = vmatmul.mubr.bf16.gmra.mrb[0].mxu0 %v238
  %v1508 = vpop.f32.mrb[0].mxu0
  %v1509 = vadd.f32 %v1452, %v1508
  %v1510 = vpop.f32.mrb[0].mxu0
  %v1511 = vpop.f32.mrb[0].mxu0
  %v1512 = vadd.f32 %v1455, %v1511
  %v1513 = vpop.f32.mrb[0].mxu0
  %1514 = vmatprep.mubr.bf16.mxu0 %v247
  %1515 = vmatmul.mubr.bf16.gmra.mrb[0].mxu0 %v246
  %v1516 = vpop.f32.mrb[0].mxu0
  %v1517 = vadd.f32 %v1460, %v1516
  %v1518 = vpop.f32.mrb[0].mxu0
  %v1519 = vpop.f32.mrb[0].mxu0
  %v1520 = vadd.f32 %v1463, %v1519
  %v1521 = vpop.f32.mrb[0].mxu0
  %1522 = vmatprep.mubr.bf16.mxu0 %v255
  %1523 = vmatmul.mubr.bf16.gmra.mrb[0].mxu0 %v254
  %v1524 = vpop.f32.mrb[0].mxu0
  %v1525 = vadd.f32 %v1468, %v1524
  %v1526 = vpop.f32.mrb[0].mxu0
  %v1527 = vpop.f32.mrb[0].mxu0
  %v1528 = vadd.f32 %v1471, %v1527
  %v1529 = vpop.f32.mrb[0].mxu0
  %1530 = vdwg.mxu0
  %1531 = vmatprep.subr.bf16.mxu0 0
  %1532 = vmatpush1.bf16.msra.mxu0 %v1321
  %1533 = vmatprep.subr.bf16.mxu0 0
  %1534 = vmatpush1.bf16.msra.mxu0 %v1322
  %1535 = vmatprep.subr.bf16.mxu0 0
  %1536 = vmatpush1.bf16.msra.mxu0 %v1323
  %1537 = vmatprep.subr.bf16.mxu0 0
  %1538 = vmatpush1.bf16.msra.mxu0 %v1324
  %1539 = vmatprep.subr.bf16.mxu0 0
  %1540 = vmatpush1.bf16.msra.mxu0 %v1325
  %1541 = vmatprep.subr.bf16.mxu0 0
  %1542 = vmatpush1.bf16.msra.mxu0 %v1326
  %1543 = vmatprep.subr.bf16.mxu0 0
  %1544 = vmatpush1.bf16.msra.mxu0 %v1327
  %1545 = vmatprep.subr.bf16.mxu0 0
  %1546 = vmatpush1.bf16.msra.mxu0 %v1328
  %1547 = vmatprep.subr.bf16.mxu0 0
  %1548 = vmatpush1.bf16.msra.mxu0 %v1329
  %1549 = vmatprep.subr.bf16.mxu0 0
  %1550 = vmatpush1.bf16.msra.mxu0 %v1330
  %1551 = vmatprep.subr.bf16.mxu0 0
  %1552 = vmatpush1.bf16.msra.mxu0 %v1331
  %1553 = vmatprep.subr.bf16.mxu0 0
  %1554 = vmatpush1.bf16.msra.mxu0 %v1332
  %1555 = vmatprep.subr.bf16.mxu0 0
  %1556 = vmatpush1.bf16.msra.mxu0 %v1333
  %1557 = vmatprep.subr.bf16.mxu0 0
  %1558 = vmatpush1.bf16.msra.mxu0 %v1334
  %1559 = vmatprep.subr.bf16.mxu0 0
  %1560 = vmatpush1.bf16.msra.mxu0 %v1335
  %1561 = vmatprep.subr.bf16.mxu0 0
  %1562 = vmatpush1.bf16.msra.mxu0 %v1336
  %1563 = vmatprep.mubr.bf16.mxu0 %v241
  %1564 = vmatmul.mubr.bf16.gmra.mrb[0].mxu0 %v240
  %v1565 = vpop.f32.mrb[0].mxu0
  %v1566 = vadd.f32 %v1509, %v1565
  %v1567 = vpop.f32.mrb[0].mxu0
  %v1568 = vpop.f32.mrb[0].mxu0
  %v1569 = vadd.f32 %v1512, %v1568
  %v1570 = vpop.f32.mrb[0].mxu0
  %1571 = vmatprep.mubr.bf16.mxu0 %v249
  %1572 = vmatmul.mubr.bf16.gmra.mrb[0].mxu0 %v248
  %v1573 = vpop.f32.mrb[0].mxu0
  %v1574 = vadd.f32 %v1517, %v1573
  %v1575 = vpop.f32.mrb[0].mxu0
  %v1576 = vpop.f32.mrb[0].mxu0
  %v1577 = vadd.f32 %v1520, %v1576
  %v1578 = vpop.f32.mrb[0].mxu0
  %1579 = vmatprep.mubr.bf16.mxu0 %v257
  %1580 = vmatmul.mubr.bf16.gmra.mrb[0].mxu0 %v256
  %v1581 = vpop.f32.mrb[0].mxu0
  %v1582 = vadd.f32 %v1525, %v1581
  %v1583 = vpop.f32.mrb[0].mxu0
  %v1584 = vpop.f32.mrb[0].mxu0
  %v1585 = vadd.f32 %v1528, %v1584
  %v1586 = vpop.f32.mrb[0].mxu0
  %1587 = vdwg.mxu0
  %1588 = vmatprep.subr.bf16.mxu0 0
  %1589 = vmatpush1.bf16.msra.mxu0 %v1337
  %1590 = vmatprep.subr.bf16.mxu0 0
  %1591 = vmatpush1.bf16.msra.mxu0 %v1338
  %1592 = vmatprep.subr.bf16.mxu0 0
  %1593 = vmatpush1.bf16.msra.mxu0 %v1339
  %1594 = vmatprep.subr.bf16.mxu0 0
  %1595 = vmatpush1.bf16.msra.mxu0 %v1340
  %1596 = vmatprep.subr.bf16.mxu0 0
  %1597 = vmatpush1.bf16.msra.mxu0 %v1341
  %1598 = vmatprep.subr.bf16.mxu0 0
  %1599 = vmatpush1.bf16.msra.mxu0 %v1342
  %1600 = vmatprep.subr.bf16.mxu0 0
  %1601 = vmatpush1.bf16.msra.mxu0 %v1343
  %1602 = vmatprep.subr.bf16.mxu0 0
  %1603 = vmatpush1.bf16.msra.mxu0 %v1344
  %1604 = vmatprep.subr.bf16.mxu0 0
  %1605 = vmatpush1.bf16.msra.mxu0 %v1345
  %1606 = vmatprep.subr.bf16.mxu0 0
  %1607 = vmatpush1.bf16.msra.mxu0 %v1346
  %1608 = vmatprep.subr.bf16.mxu0 0
  %1609 = vmatpush1.bf16.msra.mxu0 %v1347
  %1610 = vmatprep.subr.bf16.mxu0 0
  %1611 = vmatpush1.bf16.msra.mxu0 %v1348
  %1612 = vmatprep.subr.bf16.mxu0 0
  %1613 = vmatpush1.bf16.msra.mxu0 %v1349
  %1614 = vmatprep.subr.bf16.mxu0 0
  %1615 = vmatpush1.bf16.msra.mxu0 %v1350
  %1616 = vmatprep.subr.bf16.mxu0 0
  %1617 = vmatpush1.bf16.msra.mxu0 %v1351
  %1618 = vmatprep.subr.bf16.mxu0 0
  %1619 = vmatpush1.bf16.msra.mxu0 %v1352
  %1620 = vmatprep.mubr.bf16.mxu0 %v243
  %1621 = vmatmul.mubr.bf16.gmra.mrb[0].mxu0 %v242
  %v1622 = vpop.f32.mrb[0].mxu0
  %v1623 = vadd.f32 %v1566, %v1622
  %v1624 = vpop.f32.mrb[0].mxu0
  %v1625 = vpop.f32.mrb[0].mxu0
  %v1626 = vadd.f32 %v1569, %v1625
  %v1627 = vpop.f32.mrb[0].mxu0
  %1628 = vmatprep.mubr.bf16.mxu0 %v251
  %1629 = vmatmul.mubr.bf16.gmra.mrb[0].mxu0 %v250
  %v1630 = vpop.f32.mrb[0].mxu0
  %v1631 = vadd.f32 %v1574, %v1630
  %v1632 = vpop.f32.mrb[0].mxu0
  %v1633 = vpop.f32.mrb[0].mxu0
  %v1634 = vadd.f32 %v1577, %v1633
  %v1635 = vpop.f32.mrb[0].mxu0
  %1636 = vmatprep.mubr.bf16.mxu0 %v259
  %1637 = vmatmul.mubr.bf16.gmra.mrb[0].mxu0 %v258
  %v1638 = vpop.f32.mrb[0].mxu0
  %v1639 = vadd.f32 %v1582, %v1638
  %v1640 = vpop.f32.mrb[0].mxu0
  %v1641 = vpop.f32.mrb[0].mxu0
  %v1642 = vadd.f32 %v1585, %v1641
  %v1643 = vpop.f32.mrb[0].mxu0
  %1644 = vdwg.mxu0
  %s1645 = scalar_lea.vmem %s2, 48
  %1646 = vst.msk [vmem:[%s1645] sm:$0xff] %vm896, %v1623
  %1647 = vst.msk [vmem:[%s1645 + $0x8] sm:$0xff] %vm896, %v1626
  %1648 = vst.msk [vmem:[%s1645 + $0x10] sm:$0xff] %vm896, %v1631
  %1649 = vst.msk [vmem:[%s1645 + $0x18] sm:$0xff] %vm896, %v1634
  %1650 = vst.msk [vmem:[%s1645 + $0x20] sm:$0xff] %vm896, %v1639
  %1651 = vst.msk [vmem:[%s1645 + $0x28] sm:$0x1f] %vm902, %v1642
  // Predicated region
  $region10: #{object_model_forward.1} parent=0 // pred_check
    _
  $region11: #{object_model_forward.1} parent=0 // pred_check_branch
    %1653 = sbr.rel (0) target = $region13
  $region12: #{object_model_forward.1} parent=0 // pred_region
    _
  $region13: #{object_model_forward.1} parent=0 // pred_fallthru
    _
  // Predicated region
  $region14: #{object_model_forward.1} parent=0 // pred_check
    _
  $region15: #{object_model_forward.1} parent=0 // pred_check_branch
    %1655 = sbr.rel (0) target = $region17
  $region16: #{object_model_forward.1} parent=0 // pred_region
    _
  $region17: #{object_model_forward.1} parent=0 // pred_fallthru
    _

</llo_original>
